<compile_context>
chip_gen: v7x
topology: tpu7x:2x2x1
jax: 0.10.0
libtpu: 0.0.40
codegen_flags: <defaults>
</compile_context>

<pallas_src>
import jax
import jax.numpy as jnp
from jax.experimental import pallas as pl
from jax.experimental.pallas import tpu as pltpu

_MIB = 1024 * 1024
_SUBLANE = {4: 8, 2: 16, 1: 32}      # dtype bytes -> min sublane rows
_MAX_LANE_WIDTH = 2048               # lane-dense block width cap (flat path)
_MIN_PALLAS_ELEMS = 16384            # below this, plain jnp wins
_MIN_STEP_BYTES = 256 * 1024         # target >= this many input bytes per grid step
_MIN_GRID_STEPS_CAP = 8              # aim for up to this many steps on big inputs


def _tpu_generation():
    """Best-effort TPU generation from device_kind; None if unknown."""
    try:
        kind = jax.devices()[0].device_kind.lower()
    except Exception:
        return None
    for gen in (7, 6, 5, 4):
        if (f"v{gen}" in kind) or kind.startswith(f"tpu{gen}"):
            return gen
    return None


def _block_budget_and_compute_dtype(x_dtype):
    """Per-generation (per-buffer block bytes, in-kernel compute dtype)."""
    gen = _tpu_generation()
    if gen == 6:
        block_bytes = 6 * _MIB   # 4 buffers = 24 MiB < 32 MiB scoped default
    elif gen == 7:
        block_bytes = 4 * _MIB   # 16 MiB/TC; both TCs fit 64 MiB physical VMEM
    else:
        block_bytes = 3 * _MIB   # v5e: 12 MiB < 16 MiB scoped default; safe default
    if jnp.dtype(x_dtype) == jnp.dtype(jnp.bfloat16) and gen in (6, 7):
        compute_dtype = jnp.bfloat16   # native bf16 VPU/EUP on v6e/v7x
    else:
        compute_dtype = jnp.float32    # v5e has no bf16 VPU/EUP; f32 is the safe default
    return block_bytes, compute_dtype


def _make_swish_kernel(compute_dtype):
    def _swish_kernel(x_ref, o_ref):
        x = x_ref[...].astype(compute_dtype)
        e = jnp.exp(-x)                                   # EUP exp (bf16-native on v6e/v7x)
        denom = 1.0 + e.astype(jnp.float32)
        s = pl.reciprocal(denom, approx=True)             # EUP vrcp instead of VALU divide
        o_ref[...] = (x.astype(jnp.float32) * s).astype(o_ref.dtype)
    return _swish_kernel


def _swish_2d(x2: jax.Array) -> jax.Array:
    """Pallas call on a 2D slab: row-tiled blocks spanning the full last dim."""
    R, C = x2.shape
    itemsize = jnp.dtype(x2.dtype).itemsize
    sublane = _SUBLANE.get(itemsize, 8)
    block_bytes, compute_dtype = _block_budget_and_compute_dtype(x2.dtype)

    bytes_per_row = max(1, C * itemsize)
    tile_r = max(sublane, block_bytes // bytes_per_row)

    # Enforce a minimum number of grid steps (scaled by input size) so DMA and
    # compute overlap and the "parallel" axis shards over v7x's 2 TensorCores.
    total_bytes = R * C * itemsize
    min_steps = max(2, min(_MIN_GRID_STEPS_CAP, total_bytes // _MIN_STEP_BYTES))
    if R >= min_steps * sublane:
        tile_r = min(tile_r, R // min_steps)

    if tile_r >= R:
        tile_r = R                    # full extent: always a legal block dim
    else:
        tile_r = max(sublane, (tile_r // sublane) * sublane)
    grid = (pl.cdiv(R, tile_r),)

    n = R * C
    cost = pl.CostEstimate(
        flops=4 * n,
        transcendentals=2 * n,                 # exp + reciprocal
        bytes_accessed=2 * n * itemsize,
    )

    return pl.pallas_call(
        _make_swish_kernel(compute_dtype),
        out_shape=jax.ShapeDtypeStruct((R, C), x2.dtype),
        grid_spec=pltpu.PrefetchScalarGridSpec(
            num_scalar_prefetch=0,
            grid=grid,
            in_specs=[pl.BlockSpec((tile_r, C), lambda i: (i, 0))],
            out_specs=pl.BlockSpec((tile_r, C), lambda i: (i, 0)),
        ),
        compiler_params=pltpu.CompilerParams(
            dimension_semantics=("parallel",),   # lets v7x shard rows over 2 TCs
        ),
        cost_estimate=cost,
    )(x2)


def swish(x: jax.Array) -> jax.Array:
    """Elementwise Swish, matching torch: x * torch.sigmoid(x)."""
    n = x.size
    if n == 0 or n < _MIN_PALLAS_ELEMS:
        # Tiny activations: a pallas_call launch is pure overhead; XLA fuses this.
        return x * jax.nn.sigmoid(x)

    orig_shape = x.shape
    itemsize = jnp.dtype(x.dtype).itemsize
    sublane = _SUBLANE.get(itemsize, 8)
    block_bytes, _ = _block_budget_and_compute_dtype(x.dtype)

    if n % 128 == 0:
        # Free row-major reshape into a lane-dense slab (no data movement).
        # Keep enough rows (>=128 after widening) so the grid-minimum logic has
        # room to make several sublane-aligned row tiles.
        width = 128
        while (width < _MAX_LANE_WIDTH
               and n % (width * 2) == 0
               and (n // (width * 2)) >= 128):
            width *= 2
        x2 = x.reshape(n // width, width)
    elif x.ndim >= 2 and orig_shape[-1] >= 128:
        C = orig_shape[-1]
        if sublane * C * itemsize > block_bytes:
            # Even the minimum legal block (sublane x C) would blow the VMEM
            # budget: let XLA fuse it rather than risk a compile-time VMEM OOM.
            return x * jax.nn.sigmoid(x)
        # Keep the natural last dim as the full-width block lane dim - no padding.
        x2 = x.reshape(-1, C)
    else:
        # Awkward ragged shape: let XLA fuse it rather than pad (extra HBM pass).
        return x * jax.nn.sigmoid(x)

    return _swish_2d(x2).reshape(orig_shape)


if __name__ == "__main__":
    key = jax.random.PRNGKey(0)
    k1, k2, k3 = jax.random.split(key, 3)

    # Small MBPO-style MLP activation (batch=2, hidden=32): uses the jnp fallback.
    x_small = jax.random.normal(k1, (2, 32), dtype=jnp.float32)
    y_small = jax.block_until_ready(swish(x_small))
    ref_small = x_small * jax.nn.sigmoid(x_small)
    assert y_small.shape == x_small.shape and y_small.dtype == x_small.dtype
    assert jnp.allclose(y_small, ref_small, atol=1e-6, rtol=1e-6)

    # Moderate slab that exercises the Pallas kernel (f32, multi-step grid).
    # Approx-reciprocal sigmoid -> compare at ~1e-3 relative level.
    x_f32 = jax.random.normal(k2, (256, 1024), dtype=jnp.float32)
    y_f32 = jax.block_until_ready(swish(x_f32))
    ref_f32 = x_f32 * jax.nn.sigmoid(x_f32)
    assert y_f32.shape == x_f32.shape and y_f32.dtype == x_f32.dtype
    assert jnp.allclose(y_f32, ref_f32, atol=5e-3, rtol=5e-3)

    # bf16 in/out: narrow HBM traffic, bf16 math on v6e/v7x, f32 math elsewhere.
    x_bf16 = jax.random.normal(k3, (256, 1024), dtype=jnp.bfloat16)
    y_bf16 = jax.block_until_ready(swish(x_bf16))
    x32 = x_bf16.astype(jnp.float32)
    ref_bf16 = (x32 * jax.nn.sigmoid(x32)).astype(jnp.bfloat16)
    assert y_bf16.shape == x_bf16.shape and y_bf16.dtype == x_bf16.dtype
    assert jnp.allclose(y_bf16.astype(jnp.float32), ref_bf16.astype(jnp.float32),
                        atol=2e-2, rtol=2e-2)

    print("KERNEL_OK")
</pallas_src>

<mosaic_0001>
module attributes {stable_mosaic.version = 11 : i64} {
  func.func @_swish_kernel(%arg0: i32, %arg1: memref<32x2048xf32, #tpu.memory_space<vmem>>, %arg2: memref<32x2048xf32, #tpu.memory_space<vmem>>) attributes {dimension_semantics = [#tpu.dimension_semantics<parallel>], iteration_bounds = array<i64: 4>, scalar_prefetch = 0 : i64, scratch_operands = 0 : i64, tpu.core_type = #tpu.core_type<tc>, window_params = [{transform_indices = @transform_0, window_bounds = array<i64: 32, 2048>}, {transform_indices = @transform_1, window_bounds = array<i64: 32, 2048>}]} {
    %c0 = arith.constant 0 : index
    %c0_0 = arith.constant 0 : index
    %0 = vector.load %arg1[%c0, %c0_0] : memref<32x2048xf32, #tpu.memory_space<vmem>>, vector<32x2048xf32>
    %cst = arith.constant 0.000000e+00 : f32
    %1 = vector.broadcast %cst : f32 to vector<32x2048xf32>
    %2 = arith.subf %1, %0 : vector<32x2048xf32>
    %3 = math.exp %2 : vector<32x2048xf32>
    %cst_1 = arith.constant 1.000000e+00 : f32
    %4 = vector.broadcast %cst_1 : f32 to vector<32x2048xf32>
    %5 = arith.addf %4, %3 : vector<32x2048xf32>
    %6 = tpu.reciprocal %5 {approx = true} : vector<32x2048xf32> -> vector<32x2048xf32>
    %7 = arith.mulf %0, %6 : vector<32x2048xf32>
    %c0_2 = arith.constant 0 : index
    %c0_3 = arith.constant 0 : index
    %8 = vector.load %arg2[%c0_2, %c0_3] : memref<32x2048xf32, #tpu.memory_space<vmem>>, vector<32x2048xf32>
    tpu.vector_store %arg2[%c0_2, %c0_3], %7 {strides = array<i32>} : memref<32x2048xf32, #tpu.memory_space<vmem>>, vector<32x2048xf32>,
    return
  }
  func.func @transform_0(%arg0: i32) -> (i32, i32) {
    %c0_i32 = arith.constant 0 : i32
    %c0_i32_0 = arith.constant 0 : i32
    return %arg0, %c0_i32 : i32, i32
  }
  func.func @transform_1(%arg0: i32) -> (i32, i32) {
    %c0_i32 = arith.constant 0 : i32
    %c0_i32_0 = arith.constant 0 : i32
    return %arg0, %c0_i32 : i32, i32
  }
}

</mosaic_0001>

<llo_original>
// kernel: tpu_custom_call.1
$region0: #{tpu_custom_call.1}
  #allocation0 [shape = 'u32[]', space=smem, size = 0x4, offset = 0x4, fixed_abs, tag = 'smem constant byte address 0x4 - core index']
  #allocation1 [shape = 'u32[144,128]{1,0:T(1,128)}', space=vmem, size = 0x12000, scoped, tag = 'internal scratch']
  %s0 = inlined_call_operand.hbm [shape: f32[128,2048], index: 0, kind: input, shape index: {}]
  %s1 = inlined_call_operand.hbm [shape: f32[128,2048], index: 1, kind: output, shape index: {}]
  %s2 = sld [smem:[#allocation0]]
  $region41: #{tpu_custom_call.1} parent=0
    _
  %s4 = ssub.s32 1, %s2
  %s5 = scalar_select 0, %s4, %s2
  $region1: #{tpu_custom_call.1} parent=0
    #allocation2 [shape = 'u8[524288]{0}', space=vmem, size = 0x80000, scoped, tag = 'input window, operand 0']
    #allocation3 [shape = 's32[2]{0}', space=sflag, size = 0x8, scoped, tag = 'scoped memory for tpu_custom_call.1']
    #allocation4 [shape = 's32[2]{0}', space=sflag, size = 0x8, scoped, tag = 'scoped memory for tpu_custom_call.1']
    #allocation5 [shape = 'u8[524288]{0}', space=vmem, size = 0x80000, scoped, tag = 'output window, operand 0']
    %6 = vsyncpa [#allocation3], 0
    %s7 = scalar_lea.sflag [#allocation3], 1
    %8 = vsyncpa %s7, 0
    %9 = vsyncpa [#allocation4], 0
    %s10 = scalar_lea.sflag [#allocation4], 1
    %11 = vsyncpa %s10, 0
    loop: start=0, step=1, limit=6
    $region2: #{tpu_custom_call.1} parent=1 // loop_pre_header
      _
    $region3: #{tpu_custom_call.1} parent=1 // loop_header
      %s13 = sphi 0, %s17
      %p14 = scmp.ge.s32.totalorder %s13, 6
      %s23 = sphi 0, %s25
      %s26 = sphi 0, %s23
      %s27 = sphi 0, %s26
      %s43 = sphi 0, %s27
      %s49 = sphi 0, %s51
      %s52 = sphi 0, %s49
      %s53 = sphi 0, %s52
      %s69 = sphi 0, %s53
    $region4: #{tpu_custom_call.1} parent=1 // loop_header_branch
      %16 = sbr.rel (%p14) target = $region8
    $region5: #{tpu_custom_call.1} parent=1 // loop_body
      %s18 = ssub.s32 %s13, 1
      %s19 = ssub.s32 %s13, 2
      %s20 = sadd.s32 %s13, 1
      %s21 = ssub.s32 %s13, %s20
      %p22 = scmp.eq.s32.totalorder %s21, 0
      %s24 = sadd.s32 %s23, 1
      %s25 = scalar_select %p22, %s23, %s24
      %p28 = pneg %p22
      %p29 = scmp.eq.s32.totalorder %s13, 3
      %p30 = por %p28, %p29
      %p31 = scmp.ne.s32.totalorder %s23, %s26
      %p32 = scmp.eq.s32.totalorder %s13, 0
      %p33 = por %p31, %p32
      %p34 = scmp.ne.s32.totalorder %s23, %s26
      %p35 = scmp.eq.s32.totalorder %s18, 3
      %p36 = por %p34, %p35
      %p37 = scmp.ne.s32.totalorder %s26, %s27
      %p38 = scmp.eq.s32.totalorder %s18, 0
      %p39 = por %p37, %p38
      %p40 = scmp.ne.s32.totalorder %s26, %s27
      %p41 = scmp.eq.s32.totalorder %s19, 3
      %p42 = por %p40, %p41
      %p44 = scmp.ne.s32.totalorder %s27, %s43
      %p45 = scmp.eq.s32.totalorder %s19, 0
      %p46 = por %p44, %p45
      %s47 = ssub.s32 %s13, %s20
      %p48 = scmp.eq.s32.totalorder %s47, 0
      %s50 = sadd.s32 %s49, 1
      %s51 = scalar_select %p48, %s49, %s50
      %p54 = pneg %p48
      %p55 = scmp.eq.s32.totalorder %s13, 3
      %p56 = por %p54, %p55
      %p57 = scmp.ne.s32.totalorder %s49, %s52
      %p58 = scmp.eq.s32.totalorder %s13, 0
      %p59 = por %p57, %p58
      %p60 = scmp.ne.s32.totalorder %s49, %s52
      %p61 = scmp.eq.s32.totalorder %s18, 3
      %p62 = por %p60, %p61
      %p63 = scmp.ne.s32.totalorder %s52, %s53
      %p64 = scmp.eq.s32.totalorder %s18, 0
      %p65 = por %p63, %p64
      %p66 = scmp.ne.s32.totalorder %s52, %s53
      %p67 = scmp.eq.s32.totalorder %s19, 3
      %p68 = por %p66, %p67
      %p70 = scmp.ne.s32.totalorder %s53, %s69
      %p71 = scmp.eq.s32.totalorder %s19, 0
      %p72 = por %p70, %p71
      %p73 = scmp.le.s32.totalorder 1, %s13
      %p74 = scmp.lt.s32.totalorder %s13, 5
      %p75 = pnand %p73, %p74
      %p76 = pneg %p75
      // Predicated region
      $region9: #{tpu_custom_call.1} parent=5 // pred_check
        _
      $region10: #{tpu_custom_call.1} parent=5 // pred_check_branch
        %78 = sbr.rel (%p75) target = $region12
      $region11: #{tpu_custom_call.1} parent=5 // pred_region
        %s79 = ssub.s32 %s13, 1
      $region12: #{tpu_custom_call.1} parent=5 // pred_fallthru
        _
      %p80 = scmp.lt.s32.totalorder %s13, 4
      // Predicated region
      $region13: #{tpu_custom_call.1} parent=5 // pred_check
        %p81 = pneg %p80
      $region14: #{tpu_custom_call.1} parent=5 // pred_check_branch
        %83 = sbr.rel (%p81) target = $region16
      $region15: #{tpu_custom_call.1} parent=5 // pred_region
        // Predicated region
        $region17: #{tpu_custom_call.1} parent=15 // pred_check
          %p84 = pneg %p33
        $region18: #{tpu_custom_call.1} parent=15 // pred_check_branch
          %86 = sbr.rel (%p84) target = $region20
        $region19: #{tpu_custom_call.1} parent=15 // pred_region
          %s87 = sand.u32 %s23, 1
          %s88 = scalar_lea.sflag [#allocation3], %s87
          %s89 = sand.u32 %s23, 1
          %s90 = smul.addr %s89, 512
          %s91 = scalar_lea.vmem [#allocation2], %s90
          %s92 = smul.u32 4, %s13
          %s94 = ssub.s32 8192, 8192
          %95 = vsyncadd %s88, %s94
          %s96 = smul.addr %s92, 16
          %s97 = smul.addr %s96, 128
          %s98 = scalar_lea.hbm %s0, %s97
          %s99 = sshll.u32 %s91, 4
          %s100 = int_to_ptr.vmem [resolvable:$true] %s99
          %105 = dma.hbm_to_vmem [thread:$0]  %s98, 8192, %s100, %s88, 2048, 2048, 128
        $region20: #{tpu_custom_call.1} parent=15 // pred_fallthru
          _
      $region16: #{tpu_custom_call.1} parent=5 // pred_fallthru
        _
      %p106 = scmp.le.s32.totalorder 1, %s13
      %p107 = scmp.lt.s32.totalorder %s13, 5
      %p108 = pnand %p106, %p107
      %p109 = pneg %p108
      // Predicated region
      $region21: #{tpu_custom_call.1} parent=5 // pred_check
        _
      $region22: #{tpu_custom_call.1} parent=5 // pred_check_branch
        %111 = sbr.rel (%p108) target = $region24
      $region23: #{tpu_custom_call.1} parent=5 // pred_region
        %s112 = ssub.s32 %s13, 1
        %s113 = sand.u32 %s26, 1
        %s114 = scalar_lea.sflag [#allocation3], %s113
        %s115 = sand.u32 %s26, 1
        %s116 = smul.addr %s115, 512
        %s117 = scalar_lea.vmem [#allocation2], %s116
        // Predicated region
        $region25: #{tpu_custom_call.1} parent=23 // pred_check
          %p118 = pneg %p39
        $region26: #{tpu_custom_call.1} parent=23 // pred_check_branch
          %120 = sbr.rel (%p118) target = $region28
        $region27: #{tpu_custom_call.1} parent=23 // pred_region
          %121 = dma.done %s114, 8192
        $region28: #{tpu_custom_call.1} parent=23 // pred_fallthru
          _
        %s122 = sand.u32 %s26, 1
        %s123 = scalar_lea.sflag [#allocation3], %s122
        %s124 = sand.u32 %s26, 1
        %s125 = smul.addr %s124, 512
        %s126 = scalar_lea.vmem [#allocation2], %s125
        %p127 = pneg %p39
        %p128 = pneg %p36
        %p129 = pneg %p65
        %p130 = pneg %p62
        %s131 = sand.u32 %s52, 1
        %s132 = scalar_lea.sflag [#allocation4], %s131
        %s133 = sand.u32 %s52, 1
        %s134 = smul.addr %s133, 512
        %s135 = scalar_lea.vmem [#allocation5], %s134
        %s136 = smul.u32 4, %s18
        %s137 = smul.u32 4, %s18
        %v138 = vld [vmem:[%s117] sm:$0xff]
        %v139 = vld [vmem:[%s117 + $0x8] sm:$0xff]
        %v140 = vld [vmem:[%s117 + $0x10] sm:$0xff]
        %v141 = vld [vmem:[%s117 + $0x18] sm:$0xff]
        %v142 = vld [vmem:[%s117 + $0x20] sm:$0xff]
        %v143 = vld [vmem:[%s117 + $0x28] sm:$0xff]
        %v144 = vld [vmem:[%s117 + $0x30] sm:$0xff]
        %v145 = vld [vmem:[%s117 + $0x38] sm:$0xff]
        %v146 = vld [vmem:[%s117 + $0x40] sm:$0xff]
        %v147 = vld [vmem:[%s117 + $0x48] sm:$0xff]
        %v148 = vld [vmem:[%s117 + $0x50] sm:$0xff]
        %v149 = vld [vmem:[%s117 + $0x58] sm:$0xff]
        %v150 = vld [vmem:[%s117 + $0x60] sm:$0xff]
        %v151 = vld [vmem:[%s117 + $0x68] sm:$0xff]
        %v152 = vld [vmem:[%s117 + $0x70] sm:$0xff]
        %v153 = vld [vmem:[%s117 + $0x78] sm:$0xff]
        %v154 = vld [vmem:[%s117 + $0x80] sm:$0xff]
        %v155 = vld [vmem:[%s117 + $0x88] sm:$0xff]
        %v156 = vld [vmem:[%s117 + $0x90] sm:$0xff]
        %v157 = vld [vmem:[%s117 + $0x98] sm:$0xff]
        %v158 = vld [vmem:[%s117 + $0xa0] sm:$0xff]
        %v159 = vld [vmem:[%s117 + $0xa8] sm:$0xff]
        %v160 = vld [vmem:[%s117 + $0xb0] sm:$0xff]
        %v161 = vld [vmem:[%s117 + $0xb8] sm:$0xff]
        %v162 = vld [vmem:[%s117 + $0xc0] sm:$0xff]
        %v163 = vld [vmem:[%s117 + $0xc8] sm:$0xff]
        %v164 = vld [vmem:[%s117 + $0xd0] sm:$0xff]
        %v165 = vld [vmem:[%s117 + $0xd8] sm:$0xff]
        %v166 = vld [vmem:[%s117 + $0xe0] sm:$0xff]
        %v167 = vld [vmem:[%s117 + $0xe8] sm:$0xff]
        %v168 = vld [vmem:[%s117 + $0xf0] sm:$0xff]
        %v169 = vld [vmem:[%s117 + $0xf8] sm:$0xff]
        %v170 = vld [vmem:[%s117 + $0x100] sm:$0xff]
        %v171 = vld [vmem:[%s117 + $0x108] sm:$0xff]
        %v172 = vld [vmem:[%s117 + $0x110] sm:$0xff]
        %v173 = vld [vmem:[%s117 + $0x118] sm:$0xff]
        %v174 = vld [vmem:[%s117 + $0x120] sm:$0xff]
        %v175 = vld [vmem:[%s117 + $0x128] sm:$0xff]
        %v176 = vld [vmem:[%s117 + $0x130] sm:$0xff]
        %v177 = vld [vmem:[%s117 + $0x138] sm:$0xff]
        %v178 = vld [vmem:[%s117 + $0x140] sm:$0xff]
        %v179 = vld [vmem:[%s117 + $0x148] sm:$0xff]
        %v180 = vld [vmem:[%s117 + $0x150] sm:$0xff]
        %v181 = vld [vmem:[%s117 + $0x158] sm:$0xff]
        %v182 = vld [vmem:[%s117 + $0x160] sm:$0xff]
        %v183 = vld [vmem:[%s117 + $0x168] sm:$0xff]
        %v184 = vld [vmem:[%s117 + $0x170] sm:$0xff]
        %v185 = vld [vmem:[%s117 + $0x178] sm:$0xff]
        %v186 = vld [vmem:[%s117 + $0x180] sm:$0xff]
        %v187 = vld [vmem:[%s117 + $0x188] sm:$0xff]
        %v188 = vld [vmem:[%s117 + $0x190] sm:$0xff]
        %v189 = vld [vmem:[%s117 + $0x198] sm:$0xff]
        %v190 = vld [vmem:[%s117 + $0x1a0] sm:$0xff]
        %v191 = vld [vmem:[%s117 + $0x1a8] sm:$0xff]
        %v192 = vld [vmem:[%s117 + $0x1b0] sm:$0xff]
        %v193 = vld [vmem:[%s117 + $0x1b8] sm:$0xff]
        %v194 = vld [vmem:[%s117 + $0x1c0] sm:$0xff]
        %v195 = vld [vmem:[%s117 + $0x1c8] sm:$0xff]
        %v196 = vld [vmem:[%s117 + $0x1d0] sm:$0xff]
        %v197 = vld [vmem:[%s117 + $0x1d8] sm:$0xff]
        %v198 = vld [vmem:[%s117 + $0x1e0] sm:$0xff]
        %v199 = vld [vmem:[%s117 + $0x1e8] sm:$0xff]
        %v200 = vld [vmem:[%s117 + $0x1f0] sm:$0xff]
        %v201 = vld [vmem:[%s117 + $0x1f8] sm:$0xff]
        %v202 = vsub.f32 0.0, %v138
        %v203 = vsub.f32 0.0, %v139
        %v204 = vsub.f32 0.0, %v140
        %v205 = vsub.f32 0.0, %v141
        %v206 = vsub.f32 0.0, %v142
        %v207 = vsub.f32 0.0, %v143
        %v208 = vsub.f32 0.0, %v144
        %v209 = vsub.f32 0.0, %v145
        %v210 = vsub.f32 0.0, %v146
        %v211 = vsub.f32 0.0, %v147
        %v212 = vsub.f32 0.0, %v148
        %v213 = vsub.f32 0.0, %v149
        %v214 = vsub.f32 0.0, %v150
        %v215 = vsub.f32 0.0, %v151
        %v216 = vsub.f32 0.0, %v152
        %v217 = vsub.f32 0.0, %v153
        %v218 = vsub.f32 0.0, %v154
        %v219 = vsub.f32 0.0, %v155
        %v220 = vsub.f32 0.0, %v156
        %v221 = vsub.f32 0.0, %v157
        %v222 = vsub.f32 0.0, %v158
        %v223 = vsub.f32 0.0, %v159
        %v224 = vsub.f32 0.0, %v160
        %v225 = vsub.f32 0.0, %v161
        %v226 = vsub.f32 0.0, %v162
        %v227 = vsub.f32 0.0, %v163
        %v228 = vsub.f32 0.0, %v164
        %v229 = vsub.f32 0.0, %v165
        %v230 = vsub.f32 0.0, %v166
        %v231 = vsub.f32 0.0, %v167
        %v232 = vsub.f32 0.0, %v168
        %v233 = vsub.f32 0.0, %v169
        %v234 = vsub.f32 0.0, %v170
        %v235 = vsub.f32 0.0, %v171
        %v236 = vsub.f32 0.0, %v172
        %v237 = vsub.f32 0.0, %v173
        %v238 = vsub.f32 0.0, %v174
        %v239 = vsub.f32 0.0, %v175
        %v240 = vsub.f32 0.0, %v176
        %v241 = vsub.f32 0.0, %v177
        %v242 = vsub.f32 0.0, %v178
        %v243 = vsub.f32 0.0, %v179
        %v244 = vsub.f32 0.0, %v180
        %v245 = vsub.f32 0.0, %v181
        %v246 = vsub.f32 0.0, %v182
        %v247 = vsub.f32 0.0, %v183
        %v248 = vsub.f32 0.0, %v184
        %v249 = vsub.f32 0.0, %v185
        %v250 = vsub.f32 0.0, %v186
        %v251 = vsub.f32 0.0, %v187
        %v252 = vsub.f32 0.0, %v188
        %v253 = vsub.f32 0.0, %v189
        %v254 = vsub.f32 0.0, %v190
        %v255 = vsub.f32 0.0, %v191
        %v256 = vsub.f32 0.0, %v192
        %v257 = vsub.f32 0.0, %v193
        %v258 = vsub.f32 0.0, %v194
        %v259 = vsub.f32 0.0, %v195
        %v260 = vsub.f32 0.0, %v196
        %v261 = vsub.f32 0.0, %v197
        %v262 = vsub.f32 0.0, %v198
        %v263 = vsub.f32 0.0, %v199
        %v264 = vsub.f32 0.0, %v200
        %v265 = vsub.f32 0.0, %v201
        %v266 = vmul.f32 %v202, 1.442695
        %v267 = vpow.pop %v266
        %v268 = vmul.f32 %v203, 1.442695
        %v269 = vpow.pop %v268
        %v270 = vmul.f32 %v204, 1.442695
        %v271 = vpow.pop %v270
        %v272 = vmul.f32 %v205, 1.442695
        %v273 = vpow.pop %v272
        %v274 = vmul.f32 %v206, 1.442695
        %v275 = vpow.pop %v274
        %v276 = vmul.f32 %v207, 1.442695
        %v277 = vpow.pop %v276
        %v278 = vmul.f32 %v208, 1.442695
        %v279 = vpow.pop %v278
        %v280 = vmul.f32 %v209, 1.442695
        %v281 = vpow.pop %v280
        %v282 = vmul.f32 %v210, 1.442695
        %v283 = vpow.pop %v282
        %v284 = vmul.f32 %v211, 1.442695
        %v285 = vpow.pop %v284
        %v286 = vmul.f32 %v212, 1.442695
        %v287 = vpow.pop %v286
        %v288 = vmul.f32 %v213, 1.442695
        %v289 = vpow.pop %v288
        %v290 = vmul.f32 %v214, 1.442695
        %v291 = vpow.pop %v290
        %v292 = vmul.f32 %v215, 1.442695
        %v293 = vpow.pop %v292
        %v294 = vmul.f32 %v216, 1.442695
        %v295 = vpow.pop %v294
        %v296 = vmul.f32 %v217, 1.442695
        %v297 = vpow.pop %v296
        %v298 = vmul.f32 %v218, 1.442695
        %v299 = vpow.pop %v298
        %v300 = vmul.f32 %v219, 1.442695
        %v301 = vpow.pop %v300
        %v302 = vmul.f32 %v220, 1.442695
        %v303 = vpow.pop %v302
        %v304 = vmul.f32 %v221, 1.442695
        %v305 = vpow.pop %v304
        %v306 = vmul.f32 %v222, 1.442695
        %v307 = vpow.pop %v306
        %v308 = vmul.f32 %v223, 1.442695
        %v309 = vpow.pop %v308
        %v310 = vmul.f32 %v224, 1.442695
        %v311 = vpow.pop %v310
        %v312 = vmul.f32 %v225, 1.442695
        %v313 = vpow.pop %v312
        %v314 = vmul.f32 %v226, 1.442695
        %v315 = vpow.pop %v314
        %v316 = vmul.f32 %v227, 1.442695
        %v317 = vpow.pop %v316
        %v318 = vmul.f32 %v228, 1.442695
        %v319 = vpow.pop %v318
        %v320 = vmul.f32 %v229, 1.442695
        %v321 = vpow.pop %v320
        %v322 = vmul.f32 %v230, 1.442695
        %v323 = vpow.pop %v322
        %v324 = vmul.f32 %v231, 1.442695
        %v325 = vpow.pop %v324
        %v326 = vmul.f32 %v232, 1.442695
        %v327 = vpow.pop %v326
        %v328 = vmul.f32 %v233, 1.442695
        %v329 = vpow.pop %v328
        %v330 = vmul.f32 %v234, 1.442695
        %v331 = vpow.pop %v330
        %v332 = vmul.f32 %v235, 1.442695
        %v333 = vpow.pop %v332
        %v334 = vmul.f32 %v236, 1.442695
        %v335 = vpow.pop %v334
        %v336 = vmul.f32 %v237, 1.442695
        %v337 = vpow.pop %v336
        %v338 = vmul.f32 %v238, 1.442695
        %v339 = vpow.pop %v338
        %v340 = vmul.f32 %v239, 1.442695
        %v341 = vpow.pop %v340
        %v342 = vmul.f32 %v240, 1.442695
        %v343 = vpow.pop %v342
        %v344 = vmul.f32 %v241, 1.442695
        %v345 = vpow.pop %v344
        %v346 = vmul.f32 %v242, 1.442695
        %v347 = vpow.pop %v346
        %v348 = vmul.f32 %v243, 1.442695
        %v349 = vpow.pop %v348
        %v350 = vmul.f32 %v244, 1.442695
        %v351 = vpow.pop %v350
        %v352 = vmul.f32 %v245, 1.442695
        %v353 = vpow.pop %v352
        %v354 = vmul.f32 %v246, 1.442695
        %v355 = vpow.pop %v354
        %v356 = vmul.f32 %v247, 1.442695
        %v357 = vpow.pop %v356
        %v358 = vmul.f32 %v248, 1.442695
        %v359 = vpow.pop %v358
        %v360 = vmul.f32 %v249, 1.442695
        %v361 = vpow.pop %v360
        %v362 = vmul.f32 %v250, 1.442695
        %v363 = vpow.pop %v362
        %v364 = vmul.f32 %v251, 1.442695
        %v365 = vpow.pop %v364
        %v366 = vmul.f32 %v252, 1.442695
        %v367 = vpow.pop %v366
        %v368 = vmul.f32 %v253, 1.442695
        %v369 = vpow.pop %v368
        %v370 = vmul.f32 %v254, 1.442695
        %v371 = vpow.pop %v370
        %v372 = vmul.f32 %v255, 1.442695
        %v373 = vpow.pop %v372
        %v374 = vmul.f32 %v256, 1.442695
        %v375 = vpow.pop %v374
        %v376 = vmul.f32 %v257, 1.442695
        %v377 = vpow.pop %v376
        %v378 = vmul.f32 %v258, 1.442695
        %v379 = vpow.pop %v378
        %v380 = vmul.f32 %v259, 1.442695
        %v381 = vpow.pop %v380
        %v382 = vmul.f32 %v260, 1.442695
        %v383 = vpow.pop %v382
        %v384 = vmul.f32 %v261, 1.442695
        %v385 = vpow.pop %v384
        %v386 = vmul.f32 %v262, 1.442695
        %v387 = vpow.pop %v386
        %v388 = vmul.f32 %v263, 1.442695
        %v389 = vpow.pop %v388
        %v390 = vmul.f32 %v264, 1.442695
        %v391 = vpow.pop %v390
        %v392 = vmul.f32 %v265, 1.442695
        %v393 = vpow.pop %v392
        %v394 = vadd.f32 %v267, 1.0
        %v395 = vadd.f32 %v269, 1.0
        %v396 = vadd.f32 %v271, 1.0
        %v397 = vadd.f32 %v273, 1.0
        %v398 = vadd.f32 %v275, 1.0
        %v399 = vadd.f32 %v277, 1.0
        %v400 = vadd.f32 %v279, 1.0
        %v401 = vadd.f32 %v281, 1.0
        %v402 = vadd.f32 %v283, 1.0
        %v403 = vadd.f32 %v285, 1.0
        %v404 = vadd.f32 %v287, 1.0
        %v405 = vadd.f32 %v289, 1.0
        %v406 = vadd.f32 %v291, 1.0
        %v407 = vadd.f32 %v293, 1.0
        %v408 = vadd.f32 %v295, 1.0
        %v409 = vadd.f32 %v297, 1.0
        %v410 = vadd.f32 %v299, 1.0
        %v411 = vadd.f32 %v301, 1.0
        %v412 = vadd.f32 %v303, 1.0
        %v413 = vadd.f32 %v305, 1.0
        %v414 = vadd.f32 %v307, 1.0
        %v415 = vadd.f32 %v309, 1.0
        %v416 = vadd.f32 %v311, 1.0
        %v417 = vadd.f32 %v313, 1.0
        %v418 = vadd.f32 %v315, 1.0
        %v419 = vadd.f32 %v317, 1.0
        %v420 = vadd.f32 %v319, 1.0
        %v421 = vadd.f32 %v321, 1.0
        %v422 = vadd.f32 %v323, 1.0
        %v423 = vadd.f32 %v325, 1.0
        %v424 = vadd.f32 %v327, 1.0
        %v425 = vadd.f32 %v329, 1.0
        %v426 = vadd.f32 %v331, 1.0
        %v427 = vadd.f32 %v333, 1.0
        %v428 = vadd.f32 %v335, 1.0
        %v429 = vadd.f32 %v337, 1.0
        %v430 = vadd.f32 %v339, 1.0
        %v431 = vadd.f32 %v341, 1.0
        %v432 = vadd.f32 %v343, 1.0
        %v433 = vadd.f32 %v345, 1.0
        %v434 = vadd.f32 %v347, 1.0
        %v435 = vadd.f32 %v349, 1.0
        %v436 = vadd.f32 %v351, 1.0
        %v437 = vadd.f32 %v353, 1.0
        %v438 = vadd.f32 %v355, 1.0
        %v439 = vadd.f32 %v357, 1.0
        %v440 = vadd.f32 %v359, 1.0
        %v441 = vadd.f32 %v361, 1.0
        %v442 = vadd.f32 %v363, 1.0
        %v443 = vadd.f32 %v365, 1.0
        %v444 = vadd.f32 %v367, 1.0
        %v445 = vadd.f32 %v369, 1.0
        %v446 = vadd.f32 %v371, 1.0
        %v447 = vadd.f32 %v373, 1.0
        %v448 = vadd.f32 %v375, 1.0
        %v449 = vadd.f32 %v377, 1.0
        %v450 = vadd.f32 %v379, 1.0
        %v451 = vadd.f32 %v381, 1.0
        %v452 = vadd.f32 %v383, 1.0
        %v453 = vadd.f32 %v385, 1.0
        %v454 = vadd.f32 %v387, 1.0
        %v455 = vadd.f32 %v389, 1.0
        %v456 = vadd.f32 %v391, 1.0
        %v457 = vadd.f32 %v393, 1.0
        %v458 = vrcp.pop %v394
        %v459 = vrcp.pop %v395
        %v460 = vrcp.pop %v396
        %v461 = vrcp.pop %v397
        %v462 = vrcp.pop %v398
        %v463 = vrcp.pop %v399
        %v464 = vrcp.pop %v400
        %v465 = vrcp.pop %v401
        %v466 = vrcp.pop %v402
        %v467 = vrcp.pop %v403
        %v468 = vrcp.pop %v404
        %v469 = vrcp.pop %v405
        %v470 = vrcp.pop %v406
        %v471 = vrcp.pop %v407
        %v472 = vrcp.pop %v408
        %v473 = vrcp.pop %v409
        %v474 = vrcp.pop %v410
        %v475 = vrcp.pop %v411
        %v476 = vrcp.pop %v412
        %v477 = vrcp.pop %v413
        %v478 = vrcp.pop %v414
        %v479 = vrcp.pop %v415
        %v480 = vrcp.pop %v416
        %v481 = vrcp.pop %v417
        %v482 = vrcp.pop %v418
        %v483 = vrcp.pop %v419
        %v484 = vrcp.pop %v420
        %v485 = vrcp.pop %v421
        %v486 = vrcp.pop %v422
        %v487 = vrcp.pop %v423
        %v488 = vrcp.pop %v424
        %v489 = vrcp.pop %v425
        %v490 = vrcp.pop %v426
        %v491 = vrcp.pop %v427
        %v492 = vrcp.pop %v428
        %v493 = vrcp.pop %v429
        %v494 = vrcp.pop %v430
        %v495 = vrcp.pop %v431
        %v496 = vrcp.pop %v432
        %v497 = vrcp.pop %v433
        %v498 = vrcp.pop %v434
        %v499 = vrcp.pop %v435
        %v500 = vrcp.pop %v436
        %v501 = vrcp.pop %v437
        %v502 = vrcp.pop %v438
        %v503 = vrcp.pop %v439
        %v504 = vrcp.pop %v440
        %v505 = vrcp.pop %v441
        %v506 = vrcp.pop %v442
        %v507 = vrcp.pop %v443
        %v508 = vrcp.pop %v444
        %v509 = vrcp.pop %v445
        %v510 = vrcp.pop %v446
        %v511 = vrcp.pop %v447
        %v512 = vrcp.pop %v448
        %v513 = vrcp.pop %v449
        %v514 = vrcp.pop %v450
        %v515 = vrcp.pop %v451
        %v516 = vrcp.pop %v452
        %v517 = vrcp.pop %v453
        %v518 = vrcp.pop %v454
        %v519 = vrcp.pop %v455
        %v520 = vrcp.pop %v456
        %v521 = vrcp.pop %v457
        %v522 = vmul.f32 %v138, %v458
        %v523 = vmul.f32 %v139, %v459
        %v524 = vmul.f32 %v140, %v460
        %v525 = vmul.f32 %v141, %v461
        %v526 = vmul.f32 %v142, %v462
        %v527 = vmul.f32 %v143, %v463
        %v528 = vmul.f32 %v144, %v464
        %v529 = vmul.f32 %v145, %v465
        %v530 = vmul.f32 %v146, %v466
        %v531 = vmul.f32 %v147, %v467
        %v532 = vmul.f32 %v148, %v468
        %v533 = vmul.f32 %v149, %v469
        %v534 = vmul.f32 %v150, %v470
        %v535 = vmul.f32 %v151, %v471
        %v536 = vmul.f32 %v152, %v472
        %v537 = vmul.f32 %v153, %v473
        %v538 = vmul.f32 %v154, %v474
        %v539 = vmul.f32 %v155, %v475
        %v540 = vmul.f32 %v156, %v476
        %v541 = vmul.f32 %v157, %v477
        %v542 = vmul.f32 %v158, %v478
        %v543 = vmul.f32 %v159, %v479
        %v544 = vmul.f32 %v160, %v480
        %v545 = vmul.f32 %v161, %v481
        %v546 = vmul.f32 %v162, %v482
        %v547 = vmul.f32 %v163, %v483
        %v548 = vmul.f32 %v164, %v484
        %v549 = vmul.f32 %v165, %v485
        %v550 = vmul.f32 %v166, %v486
        %v551 = vmul.f32 %v167, %v487
        %v552 = vmul.f32 %v168, %v488
        %v553 = vmul.f32 %v169, %v489
        %v554 = vmul.f32 %v170, %v490
        %v555 = vmul.f32 %v171, %v491
        %v556 = vmul.f32 %v172, %v492
        %v557 = vmul.f32 %v173, %v493
        %v558 = vmul.f32 %v174, %v494
        %v559 = vmul.f32 %v175, %v495
        %v560 = vmul.f32 %v176, %v496
        %v561 = vmul.f32 %v177, %v497
        %v562 = vmul.f32 %v178, %v498
        %v563 = vmul.f32 %v179, %v499
        %v564 = vmul.f32 %v180, %v500
        %v565 = vmul.f32 %v181, %v501
        %v566 = vmul.f32 %v182, %v502
        %v567 = vmul.f32 %v183, %v503
        %v568 = vmul.f32 %v184, %v504
        %v569 = vmul.f32 %v185, %v505
        %v570 = vmul.f32 %v186, %v506
        %v571 = vmul.f32 %v187, %v507
        %v572 = vmul.f32 %v188, %v508
        %v573 = vmul.f32 %v189, %v509
        %v574 = vmul.f32 %v190, %v510
        %v575 = vmul.f32 %v191, %v511
        %v576 = vmul.f32 %v192, %v512
        %v577 = vmul.f32 %v193, %v513
        %v578 = vmul.f32 %v194, %v514
        %v579 = vmul.f32 %v195, %v515
        %v580 = vmul.f32 %v196, %v516
        %v581 = vmul.f32 %v197, %v517
        %v582 = vmul.f32 %v198, %v518
        %v583 = vmul.f32 %v199, %v519
        %v584 = vmul.f32 %v200, %v520
        %v585 = vmul.f32 %v201, %v521
        %586 = vst [vmem:[%s135] sm:$0xff] %v522
        %587 = vst [vmem:[%s135 + $0x8] sm:$0xff] %v523
        %588 = vst [vmem:[%s135 + $0x10] sm:$0xff] %v524
        %589 = vst [vmem:[%s135 + $0x18] sm:$0xff] %v525
        %590 = vst [vmem:[%s135 + $0x20] sm:$0xff] %v526
        %591 = vst [vmem:[%s135 + $0x28] sm:$0xff] %v527
        %592 = vst [vmem:[%s135 + $0x30] sm:$0xff] %v528
        %593 = vst [vmem:[%s135 + $0x38] sm:$0xff] %v529
        %594 = vst [vmem:[%s135 + $0x40] sm:$0xff] %v530
        %595 = vst [vmem:[%s135 + $0x48] sm:$0xff] %v531
        %596 = vst [vmem:[%s135 + $0x50] sm:$0xff] %v532
        %597 = vst [vmem:[%s135 + $0x58] sm:$0xff] %v533
        %598 = vst [vmem:[%s135 + $0x60] sm:$0xff] %v534
        %599 = vst [vmem:[%s135 + $0x68] sm:$0xff] %v535
        %600 = vst [vmem:[%s135 + $0x70] sm:$0xff] %v536
        %601 = vst [vmem:[%s135 + $0x78] sm:$0xff] %v537
        %602 = vst [vmem:[%s135 + $0x80] sm:$0xff] %v538
        %603 = vst [vmem:[%s135 + $0x88] sm:$0xff] %v539
        %604 = vst [vmem:[%s135 + $0x90] sm:$0xff] %v540
        %605 = vst [vmem:[%s135 + $0x98] sm:$0xff] %v541
        %606 = vst [vmem:[%s135 + $0xa0] sm:$0xff] %v542
        %607 = vst [vmem:[%s135 + $0xa8] sm:$0xff] %v543
        %608 = vst [vmem:[%s135 + $0xb0] sm:$0xff] %v544
        %609 = vst [vmem:[%s135 + $0xb8] sm:$0xff] %v545
        %610 = vst [vmem:[%s135 + $0xc0] sm:$0xff] %v546
        %611 = vst [vmem:[%s135 + $0xc8] sm:$0xff] %v547
        %612 = vst [vmem:[%s135 + $0xd0] sm:$0xff] %v548
        %613 = vst [vmem:[%s135 + $0xd8] sm:$0xff] %v549
        %614 = vst [vmem:[%s135 + $0xe0] sm:$0xff] %v550
        %615 = vst [vmem:[%s135 + $0xe8] sm:$0xff] %v551
        %616 = vst [vmem:[%s135 + $0xf0] sm:$0xff] %v552
        %617 = vst [vmem:[%s135 + $0xf8] sm:$0xff] %v553
        %618 = vst [vmem:[%s135 + $0x100] sm:$0xff] %v554
        %619 = vst [vmem:[%s135 + $0x108] sm:$0xff] %v555
        %620 = vst [vmem:[%s135 + $0x110] sm:$0xff] %v556
        %621 = vst [vmem:[%s135 + $0x118] sm:$0xff] %v557
        %622 = vst [vmem:[%s135 + $0x120] sm:$0xff] %v558
        %623 = vst [vmem:[%s135 + $0x128] sm:$0xff] %v559
        %624 = vst [vmem:[%s135 + $0x130] sm:$0xff] %v560
        %625 = vst [vmem:[%s135 + $0x138] sm:$0xff] %v561
        %626 = vst [vmem:[%s135 + $0x140] sm:$0xff] %v562
        %627 = vst [vmem:[%s135 + $0x148] sm:$0xff] %v563
        %628 = vst [vmem:[%s135 + $0x150] sm:$0xff] %v564
        %629 = vst [vmem:[%s135 + $0x158] sm:$0xff] %v565
        %630 = vst [vmem:[%s135 + $0x160] sm:$0xff] %v566
        %631 = vst [vmem:[%s135 + $0x168] sm:$0xff] %v567
        %632 = vst [vmem:[%s135 + $0x170] sm:$0xff] %v568
        %633 = vst [vmem:[%s135 + $0x178] sm:$0xff] %v569
        %634 = vst [vmem:[%s135 + $0x180] sm:$0xff] %v570
        %635 = vst [vmem:[%s135 + $0x188] sm:$0xff] %v571
        %636 = vst [vmem:[%s135 + $0x190] sm:$0xff] %v572
        %637 = vst [vmem:[%s135 + $0x198] sm:$0xff] %v573
        %638 = vst [vmem:[%s135 + $0x1a0] sm:$0xff] %v574
        %639 = vst [vmem:[%s135 + $0x1a8] sm:$0xff] %v575
        %640 = vst [vmem:[%s135 + $0x1b0] sm:$0xff] %v576
        %641 = vst [vmem:[%s135 + $0x1b8] sm:$0xff] %v577
        %642 = vst [vmem:[%s135 + $0x1c0] sm:$0xff] %v578
        %643 = vst [vmem:[%s135 + $0x1c8] sm:$0xff] %v579
        %644 = vst [vmem:[%s135 + $0x1d0] sm:$0xff] %v580
        %645 = vst [vmem:[%s135 + $0x1d8] sm:$0xff] %v581
        %646 = vst [vmem:[%s135 + $0x1e0] sm:$0xff] %v582
        %647 = vst [vmem:[%s135 + $0x1e8] sm:$0xff] %v583
        %648 = vst [vmem:[%s135 + $0x1f0] sm:$0xff] %v584
        %649 = vst [vmem:[%s135 + $0x1f8] sm:$0xff] %v585
        %s650 = sand.u32 %s52, 1
        %s651 = scalar_lea.sflag [#allocation4], %s650
        %s652 = sand.u32 %s52, 1
        %s653 = smul.addr %s652, 512
        %s654 = scalar_lea.vmem [#allocation5], %s653
        // Predicated region
        $region29: #{tpu_custom_call.1} parent=23 // pred_check
          %p655 = pneg %p62
        $region30: #{tpu_custom_call.1} parent=23 // pred_check_branch
          %657 = sbr.rel (%p655) target = $region32
        $region31: #{tpu_custom_call.1} parent=23 // pred_region
          %s658 = smul.u32 4, %s18
          %s660 = ssub.s32 8192, 8192
          %661 = vsyncadd %s651, %s660
          %s662 = smul.addr %s658, 16
          %s663 = smul.addr %s662, 128
          %s664 = scalar_lea.hbm %s1, %s663
          %s665 = sshll.u32 %s654, 4
          %s666 = int_to_ptr.vmem [resolvable:$true] %s665
          %671 = dma.vmem_to_hbm [thread:$0]  %s666, 8192, %s664, %s651, 2048, 2048, 128
        $region32: #{tpu_custom_call.1} parent=23 // pred_fallthru
          _
      $region24: #{tpu_custom_call.1} parent=5 // pred_fallthru
        _
      %p672 = scmp.le.s32.totalorder 2, %s13
      // Predicated region
      $region33: #{tpu_custom_call.1} parent=5 // pred_check
        %p673 = pneg %p672
      $region34: #{tpu_custom_call.1} parent=5 // pred_check_branch
        %675 = sbr.rel (%p673) target = $region36
      $region35: #{tpu_custom_call.1} parent=5 // pred_region
        %s676 = ssub.s32 %s13, 2
        // Predicated region
        $region37: #{tpu_custom_call.1} parent=35 // pred_check
          %p677 = pneg %p68
        $region38: #{tpu_custom_call.1} parent=35 // pred_check_branch
          %679 = sbr.rel (%p677) target = $region40
        $region39: #{tpu_custom_call.1} parent=35 // pred_region
          %s680 = sand.u32 %s53, 1
          %s681 = scalar_lea.sflag [#allocation4], %s680
          %s682 = sand.u32 %s53, 1
          %s683 = smul.addr %s682, 512
          %s684 = scalar_lea.vmem [#allocation5], %s683
          %685 = dma.done %s681, 8192
        $region40: #{tpu_custom_call.1} parent=35 // pred_fallthru
          _
      $region36: #{tpu_custom_call.1} parent=5 // pred_fallthru
        _
    $region6: #{tpu_custom_call.1} parent=1 // loop_footer
      %s17 = sadd.s32 1, %s13
    $region7: #{tpu_custom_call.1} parent=1 // loop_footer_branch
      %12 = sbr.rel target = $region3
    $region8: #{tpu_custom_call.1} parent=1 // loop_exit
      _
    %686 = vsyncpa [#allocation3], 1
    %s687 = scalar_lea.sflag [#allocation3], 1
    %688 = vsyncpa %s687, 1
    %689 = vsyncpa [#allocation4], 1
    %s690 = scalar_lea.sflag [#allocation4], 1
    %691 = vsyncpa %s690, 1

</llo_original>
